<compile_context>
chip_gen: v7x
topology: tpu7x:2x2x1
jax: 0.10.0
libtpu: 0.0.40
codegen_flags: <defaults>
</compile_context>

<pallas_src>
import jax
import jax.numpy as jnp
from jax.experimental import pallas as pl
from jax.experimental.pallas import tpu as pltpu

# ---------------- model dimensions (small, consistent with the module) -------
NUM_GENE = 256             # num_gene
LAYER_SIZES = [256, 64]    # encoder layer sizes -> emb_dim = 64
HID = LAYER_SIZES[0]       # decoder hidden = decoder_sizes[-1] = 256
EMB = LAYER_SIZES[-1]      # embedding / rep dim = 64
EMB_PAD = 128              # rep padded to a full lane register
N_CLUSTERS = 10            # only used for self.mu, not in forward()


# ----------------------------------------------------------------------------
# Kernel 1: encoder MLP + decoder Linear (pre-BatchNorm), tiled over the batch.
# TODO(synk): GNN_Encoder's heterogeneous (cell/gene) graph message passing is
# not defined in the provided source (meta_data / edges unavailable); it is
# replaced by a dense Linear+ReLU stack with the same layer_sizes.
# ----------------------------------------------------------------------------
def _encode_kernel(x_ref, ew1_ref, ew2_ref, dw_ref, bias_ref,
                   rep_ref, hlin_ref):
    x = x_ref[...].astype(jnp.bfloat16)

    eb1 = bias_ref[0:1, :]                 # (1, HID)
    eb2 = bias_ref[1:2, 0:EMB_PAD]         # (1, EMB_PAD)  (zero-padded past EMB)
    db = bias_ref[2:3, :]                  # (1, HID)

    # encoder layer 1: num_gene -> 256, ReLU
    h1 = jnp.dot(x, ew1_ref[...], preferred_element_type=jnp.float32) + eb1
    h1 = jnp.maximum(h1, 0.0)

    # encoder layer 2: 256 -> 64 (computed lane-dense as 128 wide, zero padded)
    rep = jnp.dot(h1.astype(jnp.bfloat16), ew2_ref[...],
                  preferred_element_type=jnp.float32) + eb2
    rep_ref[...] = rep

    # decoder Linear: 64 -> 256 (padded contraction; padded cols/rows are zero)
    hlin = jnp.dot(rep.astype(jnp.bfloat16), dw_ref[...],
                   preferred_element_type=jnp.float32) + db
    hlin_ref[...] = hlin


# ----------------------------------------------------------------------------
# Kernel 2: BatchNorm (precomputed full-batch scale/shift) + ReLU + fused heads.
# ----------------------------------------------------------------------------
def _decode_heads_kernel(hlin_ref, bn_ref, whead_ref, bhead_ref,
                         mean_ref, disp_ref, pi_ref):
    h = hlin_ref[...]
    scale = bn_ref[0:1, :]
    shift = bn_ref[1:2, :]
    h = jnp.maximum(h * scale + shift, 0.0)

    # one fused (tm, HID) x (HID, 3*NUM_GENE) matmul for mean/disp/pi heads
    md = jnp.dot(h.astype(jnp.bfloat16), whead_ref[...],
                 preferred_element_type=jnp.float32) + bhead_ref[...]
    m = md[:, 0:NUM_GENE]
    d = md[:, NUM_GENE:2 * NUM_GENE]
    p = md[:, 2 * NUM_GENE:3 * NUM_GENE]

    # MeanAct: clamp(exp(x), 1e-5, 1e6)
    mean_ref[...] = jnp.clip(jnp.exp(m), 1e-5, 1e6)
    # DispAct: clamp(softplus(x), 1e-4, 1e4)
    disp_ref[...] = jnp.clip(jax.nn.softplus(d), 1e-4, 1e4)
    # pi head: sigmoid
    pi_ref[...] = jax.nn.sigmoid(p)


def scgpcl_forward(x, params, tm=128):
    """Returns (mean, disp, pi, rep) like scGPCL.forward(view)."""
    (ew1, eb1, ew2, eb2, dw, db, gamma, beta,
     mw, mb, dpw, dpb, pw, pb) = params

    n = x.shape[0]
    n_pad = ((n + tm - 1) // tm) * tm
    grid = n_pad // tm
    if n_pad != n:
        x = jnp.pad(x, ((0, n_pad - n), (0, 0)))

    # ---- pack / pad / bf16-cast weights once in the wrapper ------------------
    ew1_b = ew1.astype(jnp.bfloat16)                                   # (NG, HID)
    ew2_p = jnp.pad(ew2, ((0, 0), (0, EMB_PAD - EMB))).astype(jnp.bfloat16)  # (HID, 128)
    dw_p = jnp.pad(dw, ((0, EMB_PAD - EMB), (0, 0))).astype(jnp.bfloat16)    # (128, HID)
    bias1 = jnp.concatenate(
        [eb1, jnp.pad(eb2, ((0, 0), (0, HID - EMB))), db], axis=0)     # (3, HID) f32
    w_heads = jnp.concatenate([mw, dpw, pw], axis=1).astype(jnp.bfloat16)    # (HID, 3*NG)
    b_heads = jnp.concatenate([mb, dpb, pb], axis=1)                   # (1, 3*NG) f32

    const2 = lambda i: (0, 0)
    row_tile = lambda i: (i, 0)
    cp = pltpu.CompilerParams(dimension_semantics=("parallel",))

    # ---- pass 1: encoder + decoder Linear, tiled over batch ------------------
    rep_pad, hlin = pl.pallas_call(
        _encode_kernel,
        grid=(grid,),
        in_specs=[
            pl.BlockSpec((tm, NUM_GENE), row_tile),
            pl.BlockSpec((NUM_GENE, HID), const2),
            pl.BlockSpec((HID, EMB_PAD), const2),
            pl.BlockSpec((EMB_PAD, HID), const2),
            pl.BlockSpec((3, HID), const2),
        ],
        out_specs=(
            pl.BlockSpec((tm, EMB_PAD), row_tile),
            pl.BlockSpec((tm, HID), row_tile),
        ),
        out_shape=(
            jax.ShapeDtypeStruct((n_pad, EMB_PAD), jnp.float32),
            jax.ShapeDtypeStruct((n_pad, HID), jnp.float32),
        ),
        compiler_params=cp,
    )(x, ew1_b, ew2_p, dw_p, bias1)

    # ---- full-batch BatchNorm1d statistics (training mode, biased variance) --
    # Tiny (n, HID) reduction kept in plain JAX so BN stats cover the whole
    # batch even though the matmuls are tiled.
    h_valid = hlin[:n]
    mu = jnp.mean(h_valid, axis=0, keepdims=True)
    var = jnp.mean((h_valid - mu) ** 2, axis=0, keepdims=True)
    scale = gamma * jax.lax.rsqrt(var + 1e-5)
    shift = beta - mu * scale
    bn = jnp.concatenate([scale, shift], axis=0)                       # (2, HID)

    # ---- pass 2: BN + ReLU + fused ZINB heads, tiled over batch --------------
    mean, disp, pi = pl.pallas_call(
        _decode_heads_kernel,
        grid=(grid,),
        in_specs=[
            pl.BlockSpec((tm, HID), row_tile),
            pl.BlockSpec((2, HID), const2),
            pl.BlockSpec((HID, 3 * NUM_GENE), const2),
            pl.BlockSpec((1, 3 * NUM_GENE), const2),
        ],
        out_specs=(
            pl.BlockSpec((tm, NUM_GENE), row_tile),
            pl.BlockSpec((tm, NUM_GENE), row_tile),
            pl.BlockSpec((tm, NUM_GENE), row_tile),
        ),
        out_shape=(
            jax.ShapeDtypeStruct((n_pad, NUM_GENE), jnp.float32),
            jax.ShapeDtypeStruct((n_pad, NUM_GENE), jnp.float32),
            jax.ShapeDtypeStruct((n_pad, NUM_GENE), jnp.float32),
        ),
        compiler_params=cp,
    )(hlin, bn, w_heads, b_heads)

    return mean[:n], disp[:n], pi[:n], rep_pad[:n, :EMB]


def init_params(key):
    """Deterministic init mimicking torch.nn.Linear.reset_parameters."""
    def linear(k, fan_in, fan_out):
        kw, kb = jax.random.split(k)
        bound = 1.0 / float(fan_in) ** 0.5
        w = jax.random.uniform(kw, (fan_in, fan_out), jnp.float32, -bound, bound)
        b = jax.random.uniform(kb, (1, fan_out), jnp.float32, -bound, bound)
        return w, b

    keys = jax.random.split(key, 6)
    ew1, eb1 = linear(keys[0], NUM_GENE, HID)   # encoder layer 1: num_gene -> 256
    ew2, eb2 = linear(keys[1], HID, EMB)        # encoder layer 2: 256 -> 64
    dw, db = linear(keys[2], EMB, HID)          # decoder: 64 -> 256
    gamma = jnp.ones((1, HID), jnp.float32)     # BatchNorm1d weight
    beta = jnp.zeros((1, HID), jnp.float32)     # BatchNorm1d bias
    mw, mb = linear(keys[3], HID, NUM_GENE)     # mean head
    dpw, dpb = linear(keys[4], HID, NUM_GENE)   # disp head
    pw, pb = linear(keys[5], HID, NUM_GENE)     # pi head
    return (ew1, eb1, ew2, eb2, dw, db, gamma, beta, mw, mb, dpw, dpb, pw, pb)


def _reference_forward(x, params):
    """Pure-JAX reference mirroring the kernel's bf16-matmul / f32-math path."""
    (ew1, eb1, ew2, eb2, dw, db, gamma, beta,
     mw, mb, dpw, dpb, pw, pb) = params
    bf = jnp.bfloat16
    h1 = jnp.maximum(jnp.dot(x.astype(bf), ew1.astype(bf),
                             preferred_element_type=jnp.float32) + eb1, 0.0)
    rep = jnp.dot(h1.astype(bf), ew2.astype(bf),
                  preferred_element_type=jnp.float32) + eb2
    h = jnp.dot(rep.astype(bf), dw.astype(bf),
                preferred_element_type=jnp.float32) + db
    mu = jnp.mean(h, axis=0, keepdims=True)
    var = jnp.mean((h - mu) ** 2, axis=0, keepdims=True)
    h = (h - mu) * jax.lax.rsqrt(var + 1e-5) * gamma + beta
    h = jnp.maximum(h, 0.0).astype(bf)
    m = jnp.dot(h, mw.astype(bf), preferred_element_type=jnp.float32) + mb
    d = jnp.dot(h, dpw.astype(bf), preferred_element_type=jnp.float32) + dpb
    p = jnp.dot(h, pw.astype(bf), preferred_element_type=jnp.float32) + pb
    return (jnp.clip(jnp.exp(m), 1e-5, 1e6),
            jnp.clip(jax.nn.softplus(d), 1e-4, 1e4),
            jax.nn.sigmoid(p),
            rep)


if __name__ == "__main__":
    key = jax.random.PRNGKey(0)
    k_x, k_p = jax.random.split(key)

    # synthetic "expression" view: non-negative counts-like features
    N = 16
    x = jnp.maximum(jax.random.normal(k_x, (N, NUM_GENE), jnp.float32), 0.0)
    params = init_params(k_p)

    # small tile so the demo exercises a multi-step parallel grid (grid = 2)
    mean, disp, pi, rep = scgpcl_forward(x, params, tm=8)
    jax.block_until_ready((mean, disp, pi, rep))

    assert mean.shape == (N, NUM_GENE) and disp.shape == (N, NUM_GENE)
    assert pi.shape == (N, NUM_GENE) and rep.shape == (N, EMB)
    for out in (mean, disp, pi, rep):
        assert bool(jnp.all(jnp.isfinite(out)))

    ref = _reference_forward(x, params)
    for got, want in zip((mean, disp, pi, rep), ref):
        assert bool(jnp.allclose(got, want, rtol=5e-2, atol=1e-2)), "mismatch vs reference"

    print("KERNEL_OK")
</pallas_src>

<mosaic_0001>
module attributes {stable_mosaic.version = 11 : i64} {
  func.func @_encode_kernel(%arg0: i32, %arg1: memref<8x256xf32, #tpu.memory_space<vmem>>, %arg2: memref<256x256xbf16, #tpu.memory_space<vmem>>, %arg3: memref<256x128xbf16, #tpu.memory_space<vmem>>, %arg4: memref<128x256xbf16, #tpu.memory_space<vmem>>, %arg5: memref<3x256xf32, #tpu.memory_space<vmem>>, %arg6: memref<8x128xf32, #tpu.memory_space<vmem>>, %arg7: memref<8x256xf32, #tpu.memory_space<vmem>>) attributes {dimension_semantics = [#tpu.dimension_semantics<parallel>], iteration_bounds = array<i64: 2>, scalar_prefetch = 0 : i64, scratch_operands = 0 : i64, tpu.core_type = #tpu.core_type<tc>, window_params = [{transform_indices = @transform_0, window_bounds = array<i64: 8, 256>}, {pipeline_mode = #tpu.pipeline_mode<synchronous>, transform_indices = @transform_1, window_bounds = array<i64: 256, 256>}, {pipeline_mode = #tpu.pipeline_mode<synchronous>, transform_indices = @transform_2, window_bounds = array<i64: 256, 128>}, {pipeline_mode = #tpu.pipeline_mode<synchronous>, transform_indices = @transform_3, window_bounds = array<i64: 128, 256>}, {pipeline_mode = #tpu.pipeline_mode<synchronous>, transform_indices = @transform_4, window_bounds = array<i64: 3, 256>}, {transform_indices = @transform_5, window_bounds = array<i64: 8, 128>}, {transform_indices = @transform_6, window_bounds = array<i64: 8, 256>}]} {
    %c0 = arith.constant 0 : index
    %c0_0 = arith.constant 0 : index
    %0 = vector.load %arg1[%c0, %c0_0] : memref<8x256xf32, #tpu.memory_space<vmem>>, vector<8x256xf32>
    %1 = arith.truncf %0 : vector<8x256xf32> to vector<8x256xbf16>
    %c0_1 = arith.constant 0 : index
    %c0_2 = arith.constant 0 : index
    %2 = vector.load %arg5[%c0_1, %c0_2] : memref<3x256xf32, #tpu.memory_space<vmem>>, vector<1x256xf32>
    %c1 = arith.constant 1 : index
    %c0_3 = arith.constant 0 : index
    %3 = vector.load %arg5[%c1, %c0_3] : memref<3x256xf32, #tpu.memory_space<vmem>>, vector<1x128xf32>
    %c2 = arith.constant 2 : index
    %c0_4 = arith.constant 0 : index
    %4 = vector.load %arg5[%c2, %c0_4] : memref<3x256xf32, #tpu.memory_space<vmem>>, vector<1x256xf32>
    %c0_5 = arith.constant 0 : index
    %c0_6 = arith.constant 0 : index
    %5 = vector.load %arg2[%c0_5, %c0_6] : memref<256x256xbf16, #tpu.memory_space<vmem>>, vector<256x256xbf16>
    %cst = arith.constant dense<0.000000e+00> : vector<8x256xf32>
    %6 = tpu.matmul %1, %5, %cst {dimension_numbers = #tpu.dot_dimension_numbers<[1], [0], [0], [1], [0, 0, 1, 1], [], []>} : vector<8x256xbf16>, vector<256x256xbf16>, vector<8x256xf32> -> vector<8x256xf32>
    %7 = vector.broadcast %2 : vector<1x256xf32> to vector<8x256xf32>
    %8 = arith.addf %6, %7 : vector<8x256xf32>
    %cst_7 = arith.constant 0.000000e+00 : f32
    %9 = vector.broadcast %cst_7 : f32 to vector<8x256xf32>
    %10 = arith.maximumf %8, %9 : vector<8x256xf32>
    %11 = arith.truncf %10 : vector<8x256xf32> to vector<8x256xbf16>
    %c0_8 = arith.constant 0 : index
    %c0_9 = arith.constant 0 : index
    %12 = vector.load %arg3[%c0_8, %c0_9] : memref<256x128xbf16, #tpu.memory_space<vmem>>, vector<256x128xbf16>
    %cst_10 = arith.constant dense<0.000000e+00> : vector<8x128xf32>
    %13 = tpu.matmul %11, %12, %cst_10 {dimension_numbers = #tpu.dot_dimension_numbers<[1], [0], [0], [1], [0, 0, 1, 1], [], []>} : vector<8x256xbf16>, vector<256x128xbf16>, vector<8x128xf32> -> vector<8x128xf32>
    %14 = vector.broadcast %3 : vector<1x128xf32> to vector<8x128xf32>
    %15 = arith.addf %13, %14 : vector<8x128xf32>
    %c0_11 = arith.constant 0 : index
    %c0_12 = arith.constant 0 : index
    %16 = vector.load %arg6[%c0_11, %c0_12] : memref<8x128xf32, #tpu.memory_space<vmem>>, vector<8x128xf32>
    tpu.vector_store %arg6[%c0_11, %c0_12], %15 {strides = array<i32>} : memref<8x128xf32, #tpu.memory_space<vmem>>, vector<8x128xf32>,
    %17 = arith.truncf %15 : vector<8x128xf32> to vector<8x128xbf16>
    %c0_13 = arith.constant 0 : index
    %c0_14 = arith.constant 0 : index
    %18 = vector.load %arg4[%c0_13, %c0_14] : memref<128x256xbf16, #tpu.memory_space<vmem>>, vector<128x256xbf16>
    %cst_15 = arith.constant dense<0.000000e+00> : vector<8x256xf32>
    %19 = tpu.matmul %17, %18, %cst_15 {dimension_numbers = #tpu.dot_dimension_numbers<[1], [0], [0], [1], [0, 0, 1, 1], [], []>} : vector<8x128xbf16>, vector<128x256xbf16>, vector<8x256xf32> -> vector<8x256xf32>
    %20 = vector.broadcast %4 : vector<1x256xf32> to vector<8x256xf32>
    %21 = arith.addf %19, %20 : vector<8x256xf32>
    %c0_16 = arith.constant 0 : index
    %c0_17 = arith.constant 0 : index
    %22 = vector.load %arg7[%c0_16, %c0_17] : memref<8x256xf32, #tpu.memory_space<vmem>>, vector<8x256xf32>
    tpu.vector_store %arg7[%c0_16, %c0_17], %21 {strides = array<i32>} : memref<8x256xf32, #tpu.memory_space<vmem>>, vector<8x256xf32>,
    return
  }
  func.func @transform_0(%arg0: i32) -> (i32, i32) {
    %c0_i32 = arith.constant 0 : i32
    %c0_i32_0 = arith.constant 0 : i32
    return %arg0, %c0_i32 : i32, i32
  }
  func.func @transform_1(%arg0: i32) -> (i32, i32) {
    %c0_i32 = arith.constant 0 : i32
    %c0_i32_0 = arith.constant 0 : i32
    %c0_i32_1 = arith.constant 0 : i32
    return %c0_i32, %c0_i32_0 : i32, i32
  }
  func.func @transform_2(%arg0: i32) -> (i32, i32) {
    %c0_i32 = arith.constant 0 : i32
    %c0_i32_0 = arith.constant 0 : i32
    %c0_i32_1 = arith.constant 0 : i32
    return %c0_i32, %c0_i32_0 : i32, i32
  }
  func.func @transform_3(%arg0: i32) -> (i32, i32) {
    %c0_i32 = arith.constant 0 : i32
    %c0_i32_0 = arith.constant 0 : i32
    %c0_i32_1 = arith.constant 0 : i32
    return %c0_i32, %c0_i32_0 : i32, i32
  }
  func.func @transform_4(%arg0: i32) -> (i32, i32) {
    %c0_i32 = arith.constant 0 : i32
    %c0_i32_0 = arith.constant 0 : i32
    %c0_i32_1 = arith.constant 0 : i32
    return %c0_i32, %c0_i32_0 : i32, i32
  }
  func.func @transform_5(%arg0: i32) -> (i32, i32) {
    %c0_i32 = arith.constant 0 : i32
    %c0_i32_0 = arith.constant 0 : i32
    return %arg0, %c0_i32 : i32, i32
  }
  func.func @transform_6(%arg0: i32) -> (i32, i32) {
    %c0_i32 = arith.constant 0 : i32
    %c0_i32_0 = arith.constant 0 : i32
    return %arg0, %c0_i32 : i32, i32
  }
}

</mosaic_0001>

<llo_original>
// kernel: tpu_custom_call.1
$region0: #{tpu_custom_call.1}
  #allocation0 [shape = 'u32[]', space=smem, size = 0x4, offset = 0x4, fixed_abs, tag = 'smem constant byte address 0x4 - core index']
  #allocation1 [shape = 'u32[144,128]{1,0:T(1,128)}', space=vmem, size = 0x12000, scoped, tag = 'internal scratch']
  %s0 = inlined_call_operand.hbm [shape: f32[16,256], index: 0, kind: input, shape index: {}]
  %s1 = inlined_call_operand.hbm [shape: bf16[256,256], index: 1, kind: input, shape index: {}]
  %s2 = inlined_call_operand.hbm [shape: bf16[256,128], index: 2, kind: input, shape index: {}]
  %s3 = inlined_call_operand.hbm [shape: bf16[128,256], index: 3, kind: input, shape index: {}]
  %s4 = inlined_call_operand.vmem [shape: f32[3,256], index: 4, kind: input, shape index: {}]
  %s5 = inlined_call_operand.hbm [shape: f32[16,128], index: 5, kind: output, shape index: {0}]
  %s6 = inlined_call_operand.hbm [shape: f32[16,256], index: 6, kind: output, shape index: {1}]
  %7 = xla_tuple %s5, %s6
  %s8 = sld [smem:[#allocation0]]
  $region77: #{tpu_custom_call.1} parent=0
    _
  %s10 = ssub.s32 1, %s8
  %s11 = scalar_select 0, %s10, %s8
  $region1: #{tpu_custom_call.1} parent=0
    #allocation2 [shape = 'u8[16384]{0}', space=vmem, size = 0x4000, scoped, tag = 'input window, operand 0']
    #allocation3 [shape = 's32[2]{0}', space=sflag, size = 0x8, scoped, tag = 'scoped memory for tpu_custom_call.1']
    #allocation4 [shape = 's32[2]{0}', space=sflag, size = 0x8, scoped, tag = 'scoped memory for tpu_custom_call.1']
    #allocation5 [shape = 'u8[131072]{0}', space=vmem, size = 0x20000, scoped, tag = 'input window, operand 1, single buffered']
    #allocation6 [shape = 's32[1]{0}', space=sflag, size = 0x4, scoped, tag = 'scoped memory for tpu_custom_call.1']
    #allocation7 [shape = 'u8[65536]{0}', space=vmem, size = 0x10000, scoped, tag = 'input window, operand 2, single buffered']
    #allocation8 [shape = 'u8[65536]{0}', space=vmem, size = 0x10000, scoped, tag = 'input window, operand 3, single buffered']
    #allocation9 [shape = 's32[1]{0}', space=sflag, size = 0x4, scoped, tag = 'scoped memory for tpu_custom_call.1']
    #allocation10 [shape = 'u8[8192]{0}', space=vmem, size = 0x2000, scoped, tag = 'output window, operand 0']
    #allocation11 [shape = 'u8[16384]{0}', space=vmem, size = 0x4000, scoped, tag = 'output window, operand 1']
    #allocation12 [shape = 's32[2]{0}', space=sflag, size = 0x8, scoped, tag = 'scoped memory for tpu_custom_call.1']
    %12 = vsyncpa [#allocation3], 0
    %s13 = scalar_lea.sflag [#allocation3], 1
    %14 = vsyncpa %s13, 0
    %15 = vsyncpa [#allocation6], 0
    %16 = vsyncpa [#allocation9], 0
    %17 = vsyncpa [#allocation4], 0
    %s18 = scalar_lea.sflag [#allocation4], 1
    %19 = vsyncpa %s18, 0
    %20 = vsyncpa [#allocation12], 0
    %s21 = scalar_lea.sflag [#allocation12], 1
    %22 = vsyncpa %s21, 0
    loop: start=0, step=1, limit=4
    $region2: #{tpu_custom_call.1} parent=1 // loop_pre_header
      _
    $region3: #{tpu_custom_call.1} parent=1 // loop_header
      %s24 = sphi 0, %s28
      %p25 = scmp.ge.s32.totalorder %s24, 4
      %s34 = sphi 0, %s36
      %s37 = sphi 0, %s34
      %s38 = sphi 0, %s37
      %s54 = sphi 0, %s38
      %s58 = sphi 0, %s58
      %s60 = sphi 0, %s58
      %s61 = sphi 0, %s60
      %s75 = sphi 0, %s61
      %s79 = sphi 0, %s79
      %s81 = sphi 0, %s79
      %s82 = sphi 0, %s81
      %s96 = sphi 0, %s82
      %s100 = sphi 0, %s100
      %s102 = sphi 0, %s100
      %s103 = sphi 0, %s102
      %s117 = sphi 0, %s103
      %s121 = sphi 0, %s121
      %s123 = sphi 0, %s121
      %s124 = sphi 0, %s123
      %s138 = sphi 0, %s124
      %s144 = sphi 0, %s146
      %s147 = sphi 0, %s144
      %s148 = sphi 0, %s147
      %s164 = sphi 0, %s148
      %s170 = sphi 0, %s172
      %s173 = sphi 0, %s170
      %s174 = sphi 0, %s173
      %s190 = sphi 0, %s174
    $region4: #{tpu_custom_call.1} parent=1 // loop_header_branch
      %27 = sbr.rel (%p25) target = $region8
    $region5: #{tpu_custom_call.1} parent=1 // loop_body
      %s29 = ssub.s32 %s24, 1
      %s30 = ssub.s32 %s24, 2
      %s31 = sadd.s32 %s24, 1
      %s32 = ssub.s32 %s24, %s31
      %p33 = scmp.eq.s32.totalorder %s32, 0
      %s35 = sadd.s32 %s34, 1
      %s36 = scalar_select %p33, %s34, %s35
      %p39 = pneg %p33
      %p40 = scmp.eq.s32.totalorder %s24, 1
      %p41 = por %p39, %p40
      %p42 = scmp.ne.s32.totalorder %s34, %s37
      %p43 = scmp.eq.s32.totalorder %s24, 0
      %p44 = por %p42, %p43
      %p45 = scmp.ne.s32.totalorder %s34, %s37
      %p46 = scmp.eq.s32.totalorder %s29, 1
      %p47 = por %p45, %p46
      %p48 = scmp.ne.s32.totalorder %s37, %s38
      %p49 = scmp.eq.s32.totalorder %s29, 0
      %p50 = por %p48, %p49
      %p51 = scmp.ne.s32.totalorder %s37, %s38
      %p52 = scmp.eq.s32.totalorder %s30, 1
      %p53 = por %p51, %p52
      %p55 = scmp.ne.s32.totalorder %s38, %s54
      %p56 = scmp.eq.s32.totalorder %s30, 0
      %p57 = por %p55, %p56
      %s59 = sadd.s32 %s58, 1
      %p62 = scmp.eq.s32.totalorder %s24, 1
      %p63 = scmp.ne.s32.totalorder %s58, %s60
      %p64 = scmp.eq.s32.totalorder %s24, 0
      %p65 = por %p63, %p64
      %p66 = scmp.ne.s32.totalorder %s58, %s60
      %p67 = scmp.eq.s32.totalorder %s29, 1
      %p68 = por %p66, %p67
      %p69 = scmp.ne.s32.totalorder %s60, %s61
      %p70 = scmp.eq.s32.totalorder %s29, 0
      %p71 = por %p69, %p70
      %p72 = scmp.ne.s32.totalorder %s60, %s61
      %p73 = scmp.eq.s32.totalorder %s30, 1
      %p74 = por %p72, %p73
      %p76 = scmp.ne.s32.totalorder %s61, %s75
      %p77 = scmp.eq.s32.totalorder %s30, 0
      %p78 = por %p76, %p77
      %s80 = sadd.s32 %s79, 1
      %p83 = scmp.eq.s32.totalorder %s24, 1
      %p84 = scmp.ne.s32.totalorder %s79, %s81
      %p85 = scmp.eq.s32.totalorder %s24, 0
      %p86 = por %p84, %p85
      %p87 = scmp.ne.s32.totalorder %s79, %s81
      %p88 = scmp.eq.s32.totalorder %s29, 1
      %p89 = por %p87, %p88
      %p90 = scmp.ne.s32.totalorder %s81, %s82
      %p91 = scmp.eq.s32.totalorder %s29, 0
      %p92 = por %p90, %p91
      %p93 = scmp.ne.s32.totalorder %s81, %s82
      %p94 = scmp.eq.s32.totalorder %s30, 1
      %p95 = por %p93, %p94
      %p97 = scmp.ne.s32.totalorder %s82, %s96
      %p98 = scmp.eq.s32.totalorder %s30, 0
      %p99 = por %p97, %p98
      %s101 = sadd.s32 %s100, 1
      %p104 = scmp.eq.s32.totalorder %s24, 1
      %p105 = scmp.ne.s32.totalorder %s100, %s102
      %p106 = scmp.eq.s32.totalorder %s24, 0
      %p107 = por %p105, %p106
      %p108 = scmp.ne.s32.totalorder %s100, %s102
      %p109 = scmp.eq.s32.totalorder %s29, 1
      %p110 = por %p108, %p109
      %p111 = scmp.ne.s32.totalorder %s102, %s103
      %p112 = scmp.eq.s32.totalorder %s29, 0
      %p113 = por %p111, %p112
      %p114 = scmp.ne.s32.totalorder %s102, %s103
      %p115 = scmp.eq.s32.totalorder %s30, 1
      %p116 = por %p114, %p115
      %p118 = scmp.ne.s32.totalorder %s103, %s117
      %p119 = scmp.eq.s32.totalorder %s30, 0
      %p120 = por %p118, %p119
      %s122 = sadd.s32 %s121, 1
      %p125 = scmp.eq.s32.totalorder %s24, 1
      %p126 = scmp.ne.s32.totalorder %s121, %s123
      %p127 = scmp.eq.s32.totalorder %s24, 0
      %p128 = por %p126, %p127
      %p129 = scmp.ne.s32.totalorder %s121, %s123
      %p130 = scmp.eq.s32.totalorder %s29, 1
      %p131 = por %p129, %p130
      %p132 = scmp.ne.s32.totalorder %s123, %s124
      %p133 = scmp.eq.s32.totalorder %s29, 0
      %p134 = por %p132, %p133
      %p135 = scmp.ne.s32.totalorder %s123, %s124
      %p136 = scmp.eq.s32.totalorder %s30, 1
      %p137 = por %p135, %p136
      %p139 = scmp.ne.s32.totalorder %s124, %s138
      %p140 = scmp.eq.s32.totalorder %s30, 0
      %p141 = por %p139, %p140
      %s142 = ssub.s32 %s24, %s31
      %p143 = scmp.eq.s32.totalorder %s142, 0
      %s145 = sadd.s32 %s144, 1
      %s146 = scalar_select %p143, %s144, %s145
      %p149 = pneg %p143
      %p150 = scmp.eq.s32.totalorder %s24, 1
      %p151 = por %p149, %p150
      %p152 = scmp.ne.s32.totalorder %s144, %s147
      %p153 = scmp.eq.s32.totalorder %s24, 0
      %p154 = por %p152, %p153
      %p155 = scmp.ne.s32.totalorder %s144, %s147
      %p156 = scmp.eq.s32.totalorder %s29, 1
      %p157 = por %p155, %p156
      %p158 = scmp.ne.s32.totalorder %s147, %s148
      %p159 = scmp.eq.s32.totalorder %s29, 0
      %p160 = por %p158, %p159
      %p161 = scmp.ne.s32.totalorder %s147, %s148
      %p162 = scmp.eq.s32.totalorder %s30, 1
      %p163 = por %p161, %p162
      %p165 = scmp.ne.s32.totalorder %s148, %s164
      %p166 = scmp.eq.s32.totalorder %s30, 0
      %p167 = por %p165, %p166
      %s168 = ssub.s32 %s24, %s31
      %p169 = scmp.eq.s32.totalorder %s168, 0
      %s171 = sadd.s32 %s170, 1
      %s172 = scalar_select %p169, %s170, %s171
      %p175 = pneg %p169
      %p176 = scmp.eq.s32.totalorder %s24, 1
      %p177 = por %p175, %p176
      %p178 = scmp.ne.s32.totalorder %s170, %s173
      %p179 = scmp.eq.s32.totalorder %s24, 0
      %p180 = por %p178, %p179
      %p181 = scmp.ne.s32.totalorder %s170, %s173
      %p182 = scmp.eq.s32.totalorder %s29, 1
      %p183 = por %p181, %p182
      %p184 = scmp.ne.s32.totalorder %s173, %s174
      %p185 = scmp.eq.s32.totalorder %s29, 0
      %p186 = por %p184, %p185
      %p187 = scmp.ne.s32.totalorder %s173, %s174
      %p188 = scmp.eq.s32.totalorder %s30, 1
      %p189 = por %p187, %p188
      %p191 = scmp.ne.s32.totalorder %s174, %s190
      %p192 = scmp.eq.s32.totalorder %s30, 0
      %p193 = por %p191, %p192
      %p194 = scmp.le.s32.totalorder 1, %s24
      %p195 = scmp.lt.s32.totalorder %s24, 3
      %p196 = pnand %p194, %p195
      %p197 = pneg %p196
      // Predicated region
      $region9: #{tpu_custom_call.1} parent=5 // pred_check
        _
      $region10: #{tpu_custom_call.1} parent=5 // pred_check_branch
        %199 = sbr.rel (%p196) target = $region12
      $region11: #{tpu_custom_call.1} parent=5 // pred_region
        %s200 = ssub.s32 %s24, 1
        // Predicated region
        $region13: #{tpu_custom_call.1} parent=11 // pred_check
          %p201 = pneg %p71
        $region14: #{tpu_custom_call.1} parent=11 // pred_check_branch
          %203 = sbr.rel (%p201) target = $region16
        $region15: #{tpu_custom_call.1} parent=11 // pred_region
          %s205 = ssub.s32 4096, 4096
          %206 = vsyncadd [#allocation6], %s205
          %s207 = sshll.u32 [#allocation5], 4
          %s208 = int_to_ptr.vmem [resolvable:$true] %s207
          %213 = dma.hbm_to_vmem [thread:$0]  %s1, 4096, %s208, [#allocation6], 128, 128, 8
        $region16: #{tpu_custom_call.1} parent=11 // pred_fallthru
          _
        // Predicated region
        $region17: #{tpu_custom_call.1} parent=11 // pred_check
          %p214 = pneg %p92
        $region18: #{tpu_custom_call.1} parent=11 // pred_check_branch
          %216 = sbr.rel (%p214) target = $region20
        $region19: #{tpu_custom_call.1} parent=11 // pred_region
          %s218 = ssub.s32 2048, 2048
          %219 = vsyncadd [#allocation6], %s218
          %s220 = sshll.u32 [#allocation7], 4
          %s221 = int_to_ptr.vmem [resolvable:$true] %s220
          %226 = dma.hbm_to_vmem [thread:$0]  %s2, 2048, %s221, [#allocation6], 64, 64, 4
        $region20: #{tpu_custom_call.1} parent=11 // pred_fallthru
          _
        // Predicated region
        $region21: #{tpu_custom_call.1} parent=11 // pred_check
          %p227 = pneg %p113
        $region22: #{tpu_custom_call.1} parent=11 // pred_check_branch
          %229 = sbr.rel (%p227) target = $region24
        $region23: #{tpu_custom_call.1} parent=11 // pred_region
          %s231 = ssub.s32 2048, 2048
          %232 = vsyncadd [#allocation9], %s231
          %s233 = sshll.u32 [#allocation8], 4
          %s234 = int_to_ptr.vmem [resolvable:$true] %s233
          %239 = dma.hbm_to_vmem [thread:$0]  %s3, 2048, %s234, [#allocation9], 128, 128, 8
        $region24: #{tpu_custom_call.1} parent=11 // pred_fallthru
          _
        // Predicated region
        $region25: #{tpu_custom_call.1} parent=11 // pred_check
          %p240 = pneg %p134
        $region26: #{tpu_custom_call.1} parent=11 // pred_check_branch
          %242 = sbr.rel (%p240) target = $region28
        $region27: #{tpu_custom_call.1} parent=11 // pred_region
          _
        $region28: #{tpu_custom_call.1} parent=11 // pred_fallthru
          _
      $region12: #{tpu_custom_call.1} parent=5 // pred_fallthru
        _
      %p243 = scmp.lt.s32.totalorder %s24, 2
      // Predicated region
      $region29: #{tpu_custom_call.1} parent=5 // pred_check
        %p244 = pneg %p243
      $region30: #{tpu_custom_call.1} parent=5 // pred_check_branch
        %246 = sbr.rel (%p244) target = $region32
      $region31: #{tpu_custom_call.1} parent=5 // pred_region
        // Predicated region
        $region33: #{tpu_custom_call.1} parent=31 // pred_check
          %p247 = pneg %p44
        $region34: #{tpu_custom_call.1} parent=31 // pred_check_branch
          %249 = sbr.rel (%p247) target = $region36
        $region35: #{tpu_custom_call.1} parent=31 // pred_region
          %s250 = sand.u32 %s34, 1
          %s251 = scalar_lea.sflag [#allocation3], %s250
          %s252 = sand.u32 %s34, 1
          %s253 = smul.addr %s252, 16
          %s254 = scalar_lea.vmem [#allocation2], %s253
          %s256 = ssub.s32 256, 256
          %257 = vsyncadd %s251, %s256
          %s258 = smul.addr %s24, 2
          %s259 = smul.addr %s258, 128
          %s260 = scalar_lea.hbm %s0, %s259
          %s262 = sshll.u32 %s254, 4
          %s263 = int_to_ptr.vmem [resolvable:$true] %s262
          %265 = dma.hbm_to_vmem [thread:$0]  %s260, 256, %s263, %s251
        $region36: #{tpu_custom_call.1} parent=31 // pred_fallthru
          _
      $region32: #{tpu_custom_call.1} parent=5 // pred_fallthru
        _
      %p266 = scmp.le.s32.totalorder 1, %s24
      %p267 = scmp.lt.s32.totalorder %s24, 3
      %p268 = pnand %p266, %p267
      %p269 = pneg %p268
      // Predicated region
      $region37: #{tpu_custom_call.1} parent=5 // pred_check
        _
      $region38: #{tpu_custom_call.1} parent=5 // pred_check_branch
        %271 = sbr.rel (%p268) target = $region40
      $region39: #{tpu_custom_call.1} parent=5 // pred_region
        %s272 = ssub.s32 %s24, 1
        %s273 = sand.u32 %s37, 1
        %s274 = scalar_lea.sflag [#allocation3], %s273
        %s275 = sand.u32 %s37, 1
        %s276 = smul.addr %s275, 16
        %s277 = scalar_lea.vmem [#allocation2], %s276
        // Predicated region
        $region41: #{tpu_custom_call.1} parent=39 // pred_check
          %p278 = pneg %p50
        $region42: #{tpu_custom_call.1} parent=39 // pred_check_branch
          %280 = sbr.rel (%p278) target = $region44
        $region43: #{tpu_custom_call.1} parent=39 // pred_region
          %281 = dma.done %s274, 256
        $region44: #{tpu_custom_call.1} parent=39 // pred_fallthru
          _
        // Predicated region
        $region45: #{tpu_custom_call.1} parent=39 // pred_check
          %p282 = pneg %p71
        $region46: #{tpu_custom_call.1} parent=39 // pred_check_branch
          %284 = sbr.rel (%p282) target = $region48
        $region47: #{tpu_custom_call.1} parent=39 // pred_region
          %285 = dma.done [#allocation6], 4096
        $region48: #{tpu_custom_call.1} parent=39 // pred_fallthru
          _
        // Predicated region
        $region49: #{tpu_custom_call.1} parent=39 // pred_check
          %p286 = pneg %p92
        $region50: #{tpu_custom_call.1} parent=39 // pred_check_branch
          %288 = sbr.rel (%p286) target = $region52
        $region51: #{tpu_custom_call.1} parent=39 // pred_region
          %289 = dma.done [#allocation6], 2048
        $region52: #{tpu_custom_call.1} parent=39 // pred_fallthru
          _
        // Predicated region
        $region53: #{tpu_custom_call.1} parent=39 // pred_check
          %p290 = pneg %p113
        $region54: #{tpu_custom_call.1} parent=39 // pred_check_branch
          %292 = sbr.rel (%p290) target = $region56
        $region55: #{tpu_custom_call.1} parent=39 // pred_region
          %293 = dma.done [#allocation9], 2048
        $region56: #{tpu_custom_call.1} parent=39 // pred_fallthru
          _
        %s294 = sand.u32 %s37, 1
        %s295 = scalar_lea.sflag [#allocation3], %s294
        %s296 = sand.u32 %s37, 1
        %s297 = smul.addr %s296, 16
        %s298 = scalar_lea.vmem [#allocation2], %s297
        %p299 = pneg %p50
        %p300 = pneg %p47
        %p301 = pneg %p71
        %p302 = pneg %p68
        %p303 = pneg %p92
        %p304 = pneg %p89
        %p305 = pneg %p113
        %p306 = pneg %p110
        %p307 = pneg %p134
        %p308 = pneg %p131
        %p309 = pneg %p160
        %p310 = pneg %p157
        %s311 = sand.u32 %s147, 1
        %s312 = scalar_lea.sflag [#allocation4], %s311
        %s313 = sand.u32 %s147, 1
        %s314 = smul.addr %s313, 8
        %s315 = scalar_lea.vmem [#allocation10], %s314
        %p316 = pneg %p186
        %p317 = pneg %p183
        %s318 = sand.u32 %s173, 1
        %s319 = scalar_lea.sflag [#allocation12], %s318
        %s320 = sand.u32 %s173, 1
        %s321 = smul.addr %s320, 16
        %s322 = scalar_lea.vmem [#allocation11], %s321
        %v324 = vld [vmem:[%s277] sm:$0xff]
        %v325 = vld [vmem:[%s277 + $0x8] sm:$0xff]
        %v326 = vpack.c.bf16 %v324, %v324
        %v327 = vpack.c.bf16 %v325, %v325
        %v328 = vld [vmem:[%s4] ss:$4 sm:$0x3]
        %v329 = vld [vmem:[%s4 + $0x1] sm:$0x1]
        %s330 = scalar_lea.vmem %s4, 2
        %v331 = vld [vmem:[%s330] ss:$4 sm:$0x3]
        %v332 = vld [vmem:[#allocation5] sm:$0xff]
        %v333 = vld [vmem:[#allocation5 + $0x8] sm:$0xff]
        %v334 = vld [vmem:[#allocation5 + $0x10] sm:$0xff]
        %v335 = vld [vmem:[#allocation5 + $0x18] sm:$0xff]
        %v336 = vld [vmem:[#allocation5 + $0x20] sm:$0xff]
        %v337 = vld [vmem:[#allocation5 + $0x28] sm:$0xff]
        %v338 = vld [vmem:[#allocation5 + $0x30] sm:$0xff]
        %v339 = vld [vmem:[#allocation5 + $0x38] sm:$0xff]
        %v340 = vld [vmem:[#allocation5 + $0x40] sm:$0xff]
        %v341 = vld [vmem:[#allocation5 + $0x48] sm:$0xff]
        %v342 = vld [vmem:[#allocation5 + $0x50] sm:$0xff]
        %v343 = vld [vmem:[#allocation5 + $0x58] sm:$0xff]
        %v344 = vld [vmem:[#allocation5 + $0x60] sm:$0xff]
        %v345 = vld [vmem:[#allocation5 + $0x68] sm:$0xff]
        %v346 = vld [vmem:[#allocation5 + $0x70] sm:$0xff]
        %v347 = vld [vmem:[#allocation5 + $0x78] sm:$0xff]
        %v348 = vld [vmem:[#allocation5 + $0x80] sm:$0xff]
        %v349 = vld [vmem:[#allocation5 + $0x88] sm:$0xff]
        %v350 = vld [vmem:[#allocation5 + $0x90] sm:$0xff]
        %v351 = vld [vmem:[#allocation5 + $0x98] sm:$0xff]
        %v352 = vld [vmem:[#allocation5 + $0xa0] sm:$0xff]
        %v353 = vld [vmem:[#allocation5 + $0xa8] sm:$0xff]
        %v354 = vld [vmem:[#allocation5 + $0xb0] sm:$0xff]
        %v355 = vld [vmem:[#allocation5 + $0xb8] sm:$0xff]
        %v356 = vld [vmem:[#allocation5 + $0xc0] sm:$0xff]
        %v357 = vld [vmem:[#allocation5 + $0xc8] sm:$0xff]
        %v358 = vld [vmem:[#allocation5 + $0xd0] sm:$0xff]
        %v359 = vld [vmem:[#allocation5 + $0xd8] sm:$0xff]
        %v360 = vld [vmem:[#allocation5 + $0xe0] sm:$0xff]
        %v361 = vld [vmem:[#allocation5 + $0xe8] sm:$0xff]
        %v362 = vld [vmem:[#allocation5 + $0xf0] sm:$0xff]
        %v363 = vld [vmem:[#allocation5 + $0xf8] sm:$0xff]
        %v365 = vlaneseq
        %v366 = vshrl.u32 %v365, 7
        %v367 = vsub.s32 0, %v366
        %v368 = vrot.slane %v328, %v367
        %v369 = vlaneseq
        %v370 = vshrl.u32 %v369, 7
        %v371 = vsub.s32 1, %v370
        %v372 = vrot.slane %v328, %v371
        %v407 = vunpack.c.l.b16 %v332
        %v408 = vunpack.c.h.b16 %v332
        %v409 = vunpack.c.l.b16 %v333
        %v410 = vunpack.c.h.b16 %v333
        %v411 = vunpack.c.l.b16 %v334
        %v412 = vunpack.c.h.b16 %v334
        %v413 = vunpack.c.l.b16 %v335
        %v414 = vunpack.c.h.b16 %v335
        %v415 = vunpack.c.l.b16 %v336
        %v416 = vunpack.c.h.b16 %v336
        %v417 = vunpack.c.l.b16 %v337
        %v418 = vunpack.c.h.b16 %v337
        %v419 = vunpack.c.l.b16 %v338
        %v420 = vunpack.c.h.b16 %v338
        %v421 = vunpack.c.l.b16 %v339
        %v422 = vunpack.c.h.b16 %v339
        %v423 = vunpack.c.l.b16 %v340
        %v424 = vunpack.c.h.b16 %v340
        %v425 = vunpack.c.l.b16 %v341
        %v426 = vunpack.c.h.b16 %v341
        %v427 = vunpack.c.l.b16 %v342
        %v428 = vunpack.c.h.b16 %v342
        %v429 = vunpack.c.l.b16 %v343
        %v430 = vunpack.c.h.b16 %v343
        %v431 = vunpack.c.l.b16 %v344
        %v432 = vunpack.c.h.b16 %v344
        %v433 = vunpack.c.l.b16 %v345
        %v434 = vunpack.c.h.b16 %v345
        %v435 = vunpack.c.l.b16 %v346
        %v436 = vunpack.c.h.b16 %v346
        %v437 = vunpack.c.l.b16 %v347
        %v438 = vunpack.c.h.b16 %v347
        %v439 = vunpack.c.l.b16 %v348
        %v440 = vunpack.c.h.b16 %v348
        %v441 = vunpack.c.l.b16 %v349
        %v442 = vunpack.c.h.b16 %v349
        %v443 = vunpack.c.l.b16 %v350
        %v444 = vunpack.c.h.b16 %v350
        %v445 = vunpack.c.l.b16 %v351
        %v446 = vunpack.c.h.b16 %v351
        %v447 = vunpack.c.l.b16 %v352
        %v448 = vunpack.c.h.b16 %v352
        %v449 = vunpack.c.l.b16 %v353
        %v450 = vunpack.c.h.b16 %v353
        %v451 = vunpack.c.l.b16 %v354
        %v452 = vunpack.c.h.b16 %v354
        %v453 = vunpack.c.l.b16 %v355
        %v454 = vunpack.c.h.b16 %v355
        %v455 = vunpack.c.l.b16 %v356
        %v456 = vunpack.c.h.b16 %v356
        %v457 = vunpack.c.l.b16 %v357
        %v458 = vunpack.c.h.b16 %v357
        %v459 = vunpack.c.l.b16 %v358
        %v460 = vunpack.c.h.b16 %v358
        %v461 = vunpack.c.l.b16 %v359
        %v462 = vunpack.c.h.b16 %v359
        %v463 = vunpack.c.l.b16 %v360
        %v464 = vunpack.c.h.b16 %v360
        %v465 = vunpack.c.l.b16 %v361
        %v466 = vunpack.c.h.b16 %v361
        %v467 = vunpack.c.l.b16 %v362
        %v468 = vunpack.c.h.b16 %v362
        %v469 = vunpack.c.l.b16 %v363
        %v470 = vunpack.c.h.b16 %v363
        %v471 = vpack.c.b16 %v409, %v407
        %v472 = vpack.c.b16 %v410, %v408
        %v473 = vpack.c.b16 %v413, %v411
        %v474 = vpack.c.b16 %v414, %v412
        %v475 = vpack.c.b16 %v417, %v415
        %v476 = vpack.c.b16 %v418, %v416
        %v477 = vpack.c.b16 %v421, %v419
        %v478 = vpack.c.b16 %v422, %v420
        %v479 = vpack.c.b16 %v425, %v423
        %v480 = vpack.c.b16 %v426, %v424
        %v481 = vpack.c.b16 %v429, %v427
        %v482 = vpack.c.b16 %v430, %v428
        %v483 = vpack.c.b16 %v433, %v431
        %v484 = vpack.c.b16 %v434, %v432
        %v485 = vpack.c.b16 %v437, %v435
        %v486 = vpack.c.b16 %v438, %v436
        %v487 = vpack.c.b16 %v441, %v439
        %v488 = vpack.c.b16 %v442, %v440
        %v489 = vpack.c.b16 %v445, %v443
        %v490 = vpack.c.b16 %v446, %v444
        %v491 = vpack.c.b16 %v449, %v447
        %v492 = vpack.c.b16 %v450, %v448
        %v493 = vpack.c.b16 %v453, %v451
        %v494 = vpack.c.b16 %v454, %v452
        %v495 = vpack.c.b16 %v457, %v455
        %v496 = vpack.c.b16 %v458, %v456
        %v497 = vpack.c.b16 %v461, %v459
        %v498 = vpack.c.b16 %v462, %v460
        %v499 = vpack.c.b16 %v465, %v463
        %v500 = vpack.c.b16 %v466, %v464
        %v501 = vpack.c.b16 %v469, %v467
        %v502 = vpack.c.b16 %v470, %v468
        %535 = vmatprep.subr.bf16.mxu0 %v472
        %536 = vmatpush1.bf16.msra.mxu0 %v471
        %537 = vmatprep.subr.bf16.mxu0 %v474
        %538 = vmatpush1.bf16.msra.mxu0 %v473
        %539 = vmatprep.subr.bf16.mxu0 %v476
        %540 = vmatpush1.bf16.msra.mxu0 %v475
        %541 = vmatprep.subr.bf16.mxu0 %v478
        %542 = vmatpush1.bf16.msra.mxu0 %v477
        %543 = vmatprep.subr.bf16.mxu0 %v480
        %544 = vmatpush1.bf16.msra.mxu0 %v479
        %545 = vmatprep.subr.bf16.mxu0 %v482
        %546 = vmatpush1.bf16.msra.mxu0 %v481
        %547 = vmatprep.subr.bf16.mxu0 %v484
        %548 = vmatpush1.bf16.msra.mxu0 %v483
        %549 = vmatprep.subr.bf16.mxu0 %v486
        %550 = vmatpush1.bf16.msra.mxu0 %v485
        %551 = vmatprep.subr.bf16.mxu0 %v488
        %552 = vmatpush1.bf16.msra.mxu0 %v487
        %553 = vmatprep.subr.bf16.mxu0 %v490
        %554 = vmatpush1.bf16.msra.mxu0 %v489
        %555 = vmatprep.subr.bf16.mxu0 %v492
        %556 = vmatpush1.bf16.msra.mxu0 %v491
        %557 = vmatprep.subr.bf16.mxu0 %v494
        %558 = vmatpush1.bf16.msra.mxu0 %v493
        %559 = vmatprep.subr.bf16.mxu0 %v496
        %560 = vmatpush1.bf16.msra.mxu0 %v495
        %561 = vmatprep.subr.bf16.mxu0 %v498
        %562 = vmatpush1.bf16.msra.mxu0 %v497
        %563 = vmatprep.subr.bf16.mxu0 %v500
        %564 = vmatpush1.bf16.msra.mxu0 %v499
        %565 = vmatprep.subr.bf16.mxu0 %v502
        %566 = vmatpush1.bf16.msra.mxu0 %v501
        %567 = vmatprep.mubr.bf16.mxu0 %v327
        %568 = vmatmul.mubr.bf16.gmra.mrb[0].mxu0 %v326
        %v569 = vpop.f32.mrb[0].mxu0
        %v570 = vadd.f32 %v368, %v569
        %v571 = vpop.f32.mrb[0].mxu0
        %v572 = vadd.f32 %v372, %v571
        %v573 = vpop.f32.mrb[0].mxu0
        %v574 = vpop.f32.mrb[0].mxu0
        %575 = vdwg.mxu0
        %v576 = vmax.f32 %v570, 0.0
        %v577 = vmax.f32 %v572, 0.0
        %v578 = vpack.c.bf16 %v576, %v576
        %v579 = vpack.c.bf16 %v577, %v577
        %v580 = vld [vmem:[#allocation7] sm:$0xf]
        %v581 = vld [vmem:[#allocation7 + $0x4] sm:$0xf]
        %v582 = vld [vmem:[#allocation7 + $0x8] sm:$0xf]
        %v583 = vld [vmem:[#allocation7 + $0xc] sm:$0xf]
        %v584 = vld [vmem:[#allocation7 + $0x10] sm:$0xf]
        %v585 = vld [vmem:[#allocation7 + $0x14] sm:$0xf]
        %v586 = vld [vmem:[#allocation7 + $0x18] sm:$0xf]
        %v587 = vld [vmem:[#allocation7 + $0x1c] sm:$0xf]
        %v588 = vld [vmem:[#allocation7 + $0x20] sm:$0xf]
        %v589 = vld [vmem:[#allocation7 + $0x24] sm:$0xf]
        %v590 = vld [vmem:[#allocation7 + $0x28] sm:$0xf]
        %v591 = vld [vmem:[#allocation7 + $0x2c] sm:$0xf]
        %v592 = vld [vmem:[#allocation7 + $0x30] sm:$0xf]
        %v593 = vld [vmem:[#allocation7 + $0x34] sm:$0xf]
        %v594 = vld [vmem:[#allocation7 + $0x38] sm:$0xf]
        %v595 = vld [vmem:[#allocation7 + $0x3c] sm:$0xf]
        %v596 = vld [vmem:[#allocation7 + $0x40] sm:$0xf]
        %v597 = vld [vmem:[#allocation7 + $0x44] sm:$0xf]
        %v598 = vld [vmem:[#allocation7 + $0x48] sm:$0xf]
        %v599 = vld [vmem:[#allocation7 + $0x4c] sm:$0xf]
        %v600 = vld [vmem:[#allocation7 + $0x50] sm:$0xf]
        %v601 = vld [vmem:[#allocation7 + $0x54] sm:$0xf]
        %v602 = vld [vmem:[#allocation7 + $0x58] sm:$0xf]
        %v603 = vld [vmem:[#allocation7 + $0x5c] sm:$0xf]
        %v604 = vld [vmem:[#allocation7 + $0x60] sm:$0xf]
        %v605 = vld [vmem:[#allocation7 + $0x64] sm:$0xf]
        %v606 = vld [vmem:[#allocation7 + $0x68] sm:$0xf]
        %v607 = vld [vmem:[#allocation7 + $0x6c] sm:$0xf]
        %v608 = vld [vmem:[#allocation7 + $0x70] sm:$0xf]
        %v609 = vld [vmem:[#allocation7 + $0x74] sm:$0xf]
        %v610 = vld [vmem:[#allocation7 + $0x78] sm:$0xf]
        %v611 = vld [vmem:[#allocation7 + $0x7c] sm:$0xf]
        %v612 = vlaneseq
        %v613 = vshrl.u32 %v612, 7
        %v614 = vsub.s32 0, %v613
        %v615 = vrot.slane %v329, %v614
        %v648 = vunpack.c.l.b16 %v580
        %v649 = vunpack.c.l.b16 %v581
        %v650 = vunpack.c.l.b16 %v582
        %v651 = vunpack.c.l.b16 %v583
        %v652 = vunpack.c.l.b16 %v584
        %v653 = vunpack.c.l.b16 %v585
        %v654 = vunpack.c.l.b16 %v586
        %v655 = vunpack.c.l.b16 %v587
        %v656 = vunpack.c.l.b16 %v588
        %v657 = vunpack.c.l.b16 %v589
        %v658 = vunpack.c.l.b16 %v590
        %v659 = vunpack.c.l.b16 %v591
        %v660 = vunpack.c.l.b16 %v592
        %v661 = vunpack.c.l.b16 %v593
        %v662 = vunpack.c.l.b16 %v594
        %v663 = vunpack.c.l.b16 %v595
        %v664 = vunpack.c.l.b16 %v596
        %v665 = vunpack.c.l.b16 %v597
        %v666 = vunpack.c.l.b16 %v598
        %v667 = vunpack.c.l.b16 %v599
        %v668 = vunpack.c.l.b16 %v600
        %v669 = vunpack.c.l.b16 %v601
        %v670 = vunpack.c.l.b16 %v602
        %v671 = vunpack.c.l.b16 %v603
        %v672 = vunpack.c.l.b16 %v604
        %v673 = vunpack.c.l.b16 %v605
        %v674 = vunpack.c.l.b16 %v606
        %v675 = vunpack.c.l.b16 %v607
        %v676 = vunpack.c.l.b16 %v608
        %v677 = vunpack.c.l.b16 %v609
        %v678 = vunpack.c.l.b16 %v610
        %v679 = vunpack.c.l.b16 %v611
        %v680 = vpack.c.b16 %v649, %v648
        %v681 = vpack.c.b16 %v651, %v650
        %v682 = vpack.c.b16 %v653, %v652
        %v683 = vpack.c.b16 %v655, %v654
        %v684 = vpack.c.b16 %v657, %v656
        %v685 = vpack.c.b16 %v659, %v658
        %v686 = vpack.c.b16 %v661, %v660
        %v687 = vpack.c.b16 %v663, %v662
        %v688 = vpack.c.b16 %v665, %v664
        %v689 = vpack.c.b16 %v667, %v666
        %v690 = vpack.c.b16 %v669, %v668
        %v691 = vpack.c.b16 %v671, %v670
        %v692 = vpack.c.b16 %v673, %v672
        %v693 = vpack.c.b16 %v675, %v674
        %v694 = vpack.c.b16 %v677, %v676
        %v695 = vpack.c.b16 %v679, %v678
        %712 = vmatprep.subr.bf16.mxu0 0
        %713 = vmatpush1.bf16.msra.mxu0 %v680
        %714 = vmatprep.subr.bf16.mxu0 0
        %715 = vmatpush1.bf16.msra.mxu0 %v681
        %716 = vmatprep.subr.bf16.mxu0 0
        %717 = vmatpush1.bf16.msra.mxu0 %v682
        %718 = vmatprep.subr.bf16.mxu0 0
        %719 = vmatpush1.bf16.msra.mxu0 %v683
        %720 = vmatprep.subr.bf16.mxu0 0
        %721 = vmatpush1.bf16.msra.mxu0 %v684
        %722 = vmatprep.subr.bf16.mxu0 0
        %723 = vmatpush1.bf16.msra.mxu0 %v685
        %724 = vmatprep.subr.bf16.mxu0 0
        %725 = vmatpush1.bf16.msra.mxu0 %v686
        %726 = vmatprep.subr.bf16.mxu0 0
        %727 = vmatpush1.bf16.msra.mxu0 %v687
        %728 = vmatprep.subr.bf16.mxu0 0
        %729 = vmatpush1.bf16.msra.mxu0 %v688
        %730 = vmatprep.subr.bf16.mxu0 0
        %731 = vmatpush1.bf16.msra.mxu0 %v689
        %732 = vmatprep.subr.bf16.mxu0 0
        %733 = vmatpush1.bf16.msra.mxu0 %v690
        %734 = vmatprep.subr.bf16.mxu0 0
        %735 = vmatpush1.bf16.msra.mxu0 %v691
        %736 = vmatprep.subr.bf16.mxu0 0
        %737 = vmatpush1.bf16.msra.mxu0 %v692
        %738 = vmatprep.subr.bf16.mxu0 0
        %739 = vmatpush1.bf16.msra.mxu0 %v693
        %740 = vmatprep.subr.bf16.mxu0 0
        %741 = vmatpush1.bf16.msra.mxu0 %v694
        %742 = vmatprep.subr.bf16.mxu0 0
        %743 = vmatpush1.bf16.msra.mxu0 %v695
        %744 = vmatprep.mubr.bf16.mxu0 %v579
        %745 = vmatmul.mubr.bf16.gmra.mrb[0].mxu0 %v578
        %v746 = vpop.f32.mrb[0].mxu0
        %v747 = vadd.f32 %v615, %v746
        %v748 = vpop.f32.mrb[0].mxu0
        %v749 = vpop.f32.mrb[0].mxu0
        %v750 = vpop.f32.mrb[0].mxu0
        %751 = vdwg.mxu0
        %752 = vst [vmem:[%s315] sm:$0xff] %v747
        %v753 = vpack.c.bf16 %v747, %v747
        %v754 = vld [vmem:[#allocation8] sm:$0xff]
        %v755 = vld [vmem:[#allocation8 + $0x8] sm:$0xff]
        %v756 = vld [vmem:[#allocation8 + $0x10] sm:$0xff]
        %v757 = vld [vmem:[#allocation8 + $0x18] sm:$0xff]
        %v758 = vld [vmem:[#allocation8 + $0x20] sm:$0xff]
        %v759 = vld [vmem:[#allocation8 + $0x28] sm:$0xff]
        %v760 = vld [vmem:[#allocation8 + $0x30] sm:$0xff]
        %v761 = vld [vmem:[#allocation8 + $0x38] sm:$0xff]
        %v762 = vld [vmem:[#allocation8 + $0x40] sm:$0xff]
        %v763 = vld [vmem:[#allocation8 + $0x48] sm:$0xff]
        %v764 = vld [vmem:[#allocation8 + $0x50] sm:$0xff]
        %v765 = vld [vmem:[#allocation8 + $0x58] sm:$0xff]
        %v766 = vld [vmem:[#allocation8 + $0x60] sm:$0xff]
        %v767 = vld [vmem:[#allocation8 + $0x68] sm:$0xff]
        %v768 = vld [vmem:[#allocation8 + $0x70] sm:$0xff]
        %v769 = vld [vmem:[#allocation8 + $0x78] sm:$0xff]
        %v771 = vlaneseq
        %v772 = vshrl.u32 %v771, 7
        %v773 = vsub.s32 0, %v772
        %v774 = vrot.slane %v331, %v773
        %v775 = vlaneseq
        %v776 = vshrl.u32 %v775, 7
        %v777 = vsub.s32 1, %v776
        %v778 = vrot.slane %v331, %v777
        %v797 = vunpack.c.l.b16 %v754
        %v798 = vunpack.c.h.b16 %v754
        %v799 = vunpack.c.l.b16 %v755
        %v800 = vunpack.c.h.b16 %v755
        %v801 = vunpack.c.l.b16 %v756
        %v802 = vunpack.c.h.b16 %v756
        %v803 = vunpack.c.l.b16 %v757
        %v804 = vunpack.c.h.b16 %v757
        %v805 = vunpack.c.l.b16 %v758
        %v806 = vunpack.c.h.b16 %v758
        %v807 = vunpack.c.l.b16 %v759
        %v808 = vunpack.c.h.b16 %v759
        %v809 = vunpack.c.l.b16 %v760
        %v810 = vunpack.c.h.b16 %v760
        %v811 = vunpack.c.l.b16 %v761
        %v812 = vunpack.c.h.b16 %v761
        %v813 = vunpack.c.l.b16 %v762
        %v814 = vunpack.c.h.b16 %v762
        %v815 = vunpack.c.l.b16 %v763
        %v816 = vunpack.c.h.b16 %v763
        %v817 = vunpack.c.l.b16 %v764
        %v818 = vunpack.c.h.b16 %v764
        %v819 = vunpack.c.l.b16 %v765
        %v820 = vunpack.c.h.b16 %v765
        %v821 = vunpack.c.l.b16 %v766
        %v822 = vunpack.c.h.b16 %v766
        %v823 = vunpack.c.l.b16 %v767
        %v824 = vunpack.c.h.b16 %v767
        %v825 = vunpack.c.l.b16 %v768
        %v826 = vunpack.c.h.b16 %v768
        %v827 = vunpack.c.l.b16 %v769
        %v828 = vunpack.c.h.b16 %v769
        %v829 = vpack.c.b16 %v799, %v797
        %v830 = vpack.c.b16 %v800, %v798
        %v831 = vpack.c.b16 %v803, %v801
        %v832 = vpack.c.b16 %v804, %v802
        %v833 = vpack.c.b16 %v807, %v805
        %v834 = vpack.c.b16 %v808, %v806
        %v835 = vpack.c.b16 %v811, %v809
        %v836 = vpack.c.b16 %v812, %v810
        %v837 = vpack.c.b16 %v815, %v813
        %v838 = vpack.c.b16 %v816, %v814
        %v839 = vpack.c.b16 %v819, %v817
        %v840 = vpack.c.b16 %v820, %v818
        %v841 = vpack.c.b16 %v823, %v821
        %v842 = vpack.c.b16 %v824, %v822
        %v843 = vpack.c.b16 %v827, %v825
        %v844 = vpack.c.b16 %v828, %v826
        %861 = vmatprep.subr.bf16.mxu0 %v830
        %862 = vmatpush1.bf16.msra.mxu0 %v829
        %863 = vmatprep.subr.bf16.mxu0 %v832
        %864 = vmatpush1.bf16.msra.mxu0 %v831
        %865 = vmatprep.subr.bf16.mxu0 %v834
        %866 = vmatpush1.bf16.msra.mxu0 %v833
        %867 = vmatprep.subr.bf16.mxu0 %v836
        %868 = vmatpush1.bf16.msra.mxu0 %v835
        %869 = vmatprep.subr.bf16.mxu0 %v838
        %870 = vmatpush1.bf16.msra.mxu0 %v837
        %871 = vmatprep.subr.bf16.mxu0 %v840
        %872 = vmatpush1.bf16.msra.mxu0 %v839
        %873 = vmatprep.subr.bf16.mxu0 %v842
        %874 = vmatpush1.bf16.msra.mxu0 %v841
        %875 = vmatprep.subr.bf16.mxu0 %v844
        %876 = vmatpush1.bf16.msra.mxu0 %v843
        %877 = vmatprep.subr.bf16.mxu0 0
        %878 = vmatpush1.bf16.msra.mxu0 0
        %879 = vmatprep.subr.bf16.mxu0 0
        %880 = vmatpush1.bf16.msra.mxu0 0
        %881 = vmatprep.subr.bf16.mxu0 0
        %882 = vmatpush1.bf16.msra.mxu0 0
        %883 = vmatprep.subr.bf16.mxu0 0
        %884 = vmatpush1.bf16.msra.mxu0 0
        %885 = vmatprep.subr.bf16.mxu0 0
        %886 = vmatpush1.bf16.msra.mxu0 0
        %887 = vmatprep.subr.bf16.mxu0 0
        %888 = vmatpush1.bf16.msra.mxu0 0
        %889 = vmatprep.subr.bf16.mxu0 0
        %890 = vmatpush1.bf16.msra.mxu0 0
        %891 = vmatprep.subr.bf16.mxu0 0
        %892 = vmatpush1.bf16.msra.mxu0 0
        %893 = vmatprep.mubr.bf16.mxu0 0
        %894 = vmatmul.mubr.bf16.gmra.mrb[0].mxu0 %v753
        %v895 = vpop.f32.mrb[0].mxu0
        %v896 = vadd.f32 %v774, %v895
        %v897 = vpop.f32.mrb[0].mxu0
        %v898 = vadd.f32 %v778, %v897
        %v899 = vpop.f32.mrb[0].mxu0
        %v900 = vpop.f32.mrb[0].mxu0
        %901 = vdwg.mxu0
        %902 = vst [vmem:[%s322] sm:$0xff] %v896
        %903 = vst [vmem:[%s322 + $0x8] sm:$0xff] %v898
        %s904 = sand.u32 %s147, 1
        %s905 = scalar_lea.sflag [#allocation4], %s904
        %s906 = sand.u32 %s147, 1
        %s907 = smul.addr %s906, 8
        %s908 = scalar_lea.vmem [#allocation10], %s907
        %s909 = sand.u32 %s173, 1
        %s910 = scalar_lea.sflag [#allocation12], %s909
        %s911 = sand.u32 %s173, 1
        %s912 = smul.addr %s911, 16
        %s913 = scalar_lea.vmem [#allocation11], %s912
        // Predicated region
        $region57: #{tpu_custom_call.1} parent=39 // pred_check
          %p914 = pneg %p157
        $region58: #{tpu_custom_call.1} parent=39 // pred_check_branch
          %916 = sbr.rel (%p914) target = $region60
        $region59: #{tpu_custom_call.1} parent=39 // pred_region
          %s918 = ssub.s32 128, 128
          %919 = vsyncadd %s905, %s918
          %s920 = smul.addr %s29, 128
          %s921 = scalar_lea.hbm %s5, %s920
          %s923 = sshll.u32 %s908, 4
          %s924 = int_to_ptr.vmem [resolvable:$true] %s923
          %926 = dma.vmem_to_hbm [thread:$0]  %s924, 128, %s921, %s905
        $region60: #{tpu_custom_call.1} parent=39 // pred_fallthru
          _
        // Predicated region
        $region61: #{tpu_custom_call.1} parent=39 // pred_check
          %p927 = pneg %p183
        $region62: #{tpu_custom_call.1} parent=39 // pred_check_branch
          %929 = sbr.rel (%p927) target = $region64
        $region63: #{tpu_custom_call.1} parent=39 // pred_region
          %s931 = ssub.s32 256, 256
          %932 = vsyncadd %s910, %s931
          %s933 = smul.addr %s29, 2
          %s934 = smul.addr %s933, 128
          %s935 = scalar_lea.hbm %s6, %s934
          %s937 = sshll.u32 %s913, 4
          %s938 = int_to_ptr.vmem [resolvable:$true] %s937
          %940 = dma.vmem_to_hbm [thread:$0]  %s938, 256, %s935, %s910
        $region64: #{tpu_custom_call.1} parent=39 // pred_fallthru
          _
      $region40: #{tpu_custom_call.1} parent=5 // pred_fallthru
        _
      %p941 = scmp.le.s32.totalorder 2, %s24
      // Predicated region
      $region65: #{tpu_custom_call.1} parent=5 // pred_check
        %p942 = pneg %p941
      $region66: #{tpu_custom_call.1} parent=5 // pred_check_branch
        %944 = sbr.rel (%p942) target = $region68
      $region67: #{tpu_custom_call.1} parent=5 // pred_region
        %s945 = ssub.s32 %s24, 2
        // Predicated region
        $region69: #{tpu_custom_call.1} parent=67 // pred_check
          %p946 = pneg %p163
        $region70: #{tpu_custom_call.1} parent=67 // pred_check_branch
          %948 = sbr.rel (%p946) target = $region72
        $region71: #{tpu_custom_call.1} parent=67 // pred_region
          %s949 = sand.u32 %s148, 1
          %s950 = scalar_lea.sflag [#allocation4], %s949
          %s951 = sand.u32 %s148, 1
          %s952 = smul.addr %s951, 8
          %s953 = scalar_lea.vmem [#allocation10], %s952
          %954 = dma.done %s950, 128
        $region72: #{tpu_custom_call.1} parent=67 // pred_fallthru
          _
        // Predicated region
        $region73: #{tpu_custom_call.1} parent=67 // pred_check
          %p955 = pneg %p189
        $region74: #{tpu_custom_call.1} parent=67 // pred_check_branch
          %957 = sbr.rel (%p955) target = $region76
        $region75: #{tpu_custom_call.1} parent=67 // pred_region
          %s958 = sand.u32 %s174, 1
          %s959 = scalar_lea.sflag [#allocation12], %s958
          %s960 = sand.u32 %s174, 1
          %s961 = smul.addr %s960, 16
          %s962 = scalar_lea.vmem [#allocation11], %s961
          %963 = dma.done %s959, 256
        $region76: #{tpu_custom_call.1} parent=67 // pred_fallthru
          _
      $region68: #{tpu_custom_call.1} parent=5 // pred_fallthru
        _
    $region6: #{tpu_custom_call.1} parent=1 // loop_footer
      %s28 = sadd.s32 1, %s24
    $region7: #{tpu_custom_call.1} parent=1 // loop_footer_branch
      %23 = sbr.rel target = $region3
    $region8: #{tpu_custom_call.1} parent=1 // loop_exit
      _
    %964 = vsyncpa [#allocation3], 1
    %s965 = scalar_lea.sflag [#allocation3], 1
    %966 = vsyncpa %s965, 1
    %967 = vsyncpa [#allocation6], 1
    %968 = vsyncpa [#allocation9], 1
    %969 = vsyncpa [#allocation4], 1
    %s970 = scalar_lea.sflag [#allocation4], 1
    %971 = vsyncpa %s970, 1
    %972 = vsyncpa [#allocation12], 1
    %s973 = scalar_lea.sflag [#allocation12], 1
    %974 = vsyncpa %s973, 1

</llo_original>
